<compile_context>
chip_gen: v6e
topology: v6e:2x2x1
jax: 0.10.0
libtpu: 0.0.40
codegen_flags: <defaults>
</compile_context>

<pallas_src>
import jax
import jax.numpy as jnp
from jax.experimental import pallas as pl
from jax.experimental.pallas import tpu as pltpu


# ----------------------------------------------------------------------------
# Fused kernel: one batch sample per grid step.
# ----------------------------------------------------------------------------
def _make_fused_kernel(Wpp, Q1, L2):
    """Constants (all Python ints, closed over):
         Wpp : padded row width  (W + 2)
         Q1  : stage-1 window length ((H + 4) * Wpp)  -- includes a 1-row halo
         L2  : output window length (H * Wpp)

    Kernel refs:
         x_ref    : (1, C, Qx)  bf16  flattened zero-padded input
                                      (4 zero rows top/bottom, 1 zero col left)
         w1_ref   : (C, 9*C)    bf16  conv1 weights, bn1 scale folded in
         b1_ref   : (C, 1)      f32   folded bn1 bias
         fs1_ref  : (1, C, 1)   f32   filter_select[:, 0, :] for this sample
         w2_ref   : (C, 9*C)    bf16  conv2 weights, bn2 scale folded in
         b2_ref   : (C, 1)      f32   folded bn2 bias
         fs2_ref  : (1, C, 1)   f32   filter_select[:, 1, :] for this sample
         mask_ref : (1, Q1)     f32   1.0 at real image pixels of the window
         o_ref    : (1, C, L2)  f32   flattened output (rows of width Wpp)
    """

    def taps(src, length):
        # in-register im2col: the 9 conv taps are lane-shifted static slices
        # of the same flattened padded image (offset = (dy-1)*Wpp + (dx-1),
        # rebased by the 2*Wpp window offset).
        cols = [
            src[:, (dy + 1) * Wpp + dx - 1:(dy + 1) * Wpp + dx - 1 + length]
            for dy in range(3) for dx in range(3)
        ]
        return jnp.concatenate(cols, axis=0).astype(jnp.bfloat16)  # (9C, len)

    def kernel(x_ref, w1_ref, b1_ref, fs1_ref, w2_ref, b2_ref, fs2_ref,
               mask_ref, o_ref):
        x = x_ref[0].astype(jnp.float32)                       # (C, Qx)

        # -------- stage 1: conv1 (+folded bn1) * fs1, ReLU ----------------
        acc1 = jnp.dot(w1_ref[...], taps(x, Q1),
                       preferred_element_type=jnp.float32)     # (C, Q1)
        y1 = jnp.maximum(fs1_ref[0] * (acc1 + b1_ref[...]), 0.0)
        y1 = y1 * mask_ref[...]          # zero the pad / junk columns

        # -------- stage 2: conv2 (+folded bn2) + residual, * fs2, ReLU ----
        acc2 = jnp.dot(w2_ref[...], taps(y1, L2),
                       preferred_element_type=jnp.float32)     # (C, L2)
        res = x[:, 4 * Wpp:4 * Wpp + L2]                       # identity path
        y2 = jnp.maximum(fs2_ref[0] * (acc2 + b2_ref[...] + res), 0.0)
        o_ref[0] = y2.astype(o_ref.dtype)

    return kernel


# ----------------------------------------------------------------------------
# Wrapper (mirrors SelectedResNetBlock.forward).
# ----------------------------------------------------------------------------
def selected_resnet_block_forward(x_nchw, params, filter_select=None):
    N, C, H, W = x_nchw.shape
    Cout = params["w1"].shape[0]
    assert Cout == C, "stride=1 / downsample=None requires in_ch == out_ch"

    Wpp = W + 2                 # padded row width
    Qx = (H + 8) * Wpp          # input buffer length (4 zero rows each side)
    Q1 = (H + 4) * Wpp          # stage-1 window (1-row halo around the image)
    L2 = H * Wpp                # output window

    eps = 1e-5
    s1 = params["bn1_gamma"] * jax.lax.rsqrt(params["bn1_var"] + eps)
    b1 = params["bn1_beta"] - params["bn1_mean"] * s1
    s2 = params["bn2_gamma"] * jax.lax.rsqrt(params["bn2_var"] + eps)
    b2 = params["bn2_beta"] - params["bn2_mean"] * s2

    # torch conv weight (Cout, Cin, kh, kw) -> (Cout, 9*Cin); fold bn scale.
    def conv_w(w, s):
        wt = jnp.transpose(w, (0, 2, 3, 1)).reshape(Cout, 9 * C)
        return (wt * s[:, None]).astype(jnp.bfloat16)

    w1t = conv_w(params["w1"], s1)
    w2t = conv_w(params["w2"], s2)
    b1c = b1.reshape(Cout, 1).astype(jnp.float32)
    b2c = b2.reshape(Cout, 1).astype(jnp.float32)

    if filter_select is None:
        fs1 = jnp.ones((N, Cout, 1), jnp.float32)
        fs2 = jnp.ones((N, Cout, 1), jnp.float32)
    else:
        fs1 = filter_select[:, 0, :].astype(jnp.float32).reshape(N, Cout, 1)
        fs2 = filter_select[:, 1, :].astype(jnp.float32).reshape(N, Cout, 1)

    # Flattened zero-padded NCHW input in bf16 (pad + reshape only).
    x_buf = jnp.pad(x_nchw.astype(jnp.bfloat16),
                    ((0, 0), (0, 0), (4, 4), (1, Wpp - W - 1))
                    ).reshape(N, C, Qx)

    # Validity mask over the stage-1 window (1.0 at real pixels).
    mask = jnp.zeros((H + 4, Wpp), jnp.float32)
    mask = mask.at[2:H + 2, 1:W + 1].set(1.0)
    mask = mask.reshape(1, Q1)

    kernel = _make_fused_kernel(Wpp, Q1, L2)

    out_flat = pl.pallas_call(
        kernel,
        out_shape=jax.ShapeDtypeStruct((N, Cout, L2), jnp.float32),
        grid=(N,),
        in_specs=[
            pl.BlockSpec((1, C, Qx), lambda n: (n, 0, 0)),       # x (per sample)
            pl.BlockSpec((Cout, 9 * C), lambda n: (0, 0)),       # w1
            pl.BlockSpec((Cout, 1), lambda n: (0, 0)),           # b1
            pl.BlockSpec((1, Cout, 1), lambda n: (n, 0, 0)),     # fs1
            pl.BlockSpec((Cout, 9 * C), lambda n: (0, 0)),       # w2
            pl.BlockSpec((Cout, 1), lambda n: (0, 0)),           # b2
            pl.BlockSpec((1, Cout, 1), lambda n: (n, 0, 0)),     # fs2
            pl.BlockSpec((1, Q1), lambda n: (0, 0)),             # mask
        ],
        out_specs=pl.BlockSpec((1, Cout, L2), lambda n: (n, 0, 0)),
        compiler_params=pltpu.CompilerParams(
            dimension_semantics=("parallel",)),
    )(x_buf, w1t, b1c, fs1, w2t, b2c, fs2, mask)

    # (N, C, H, Wpp) -> drop the left pad column and the extra right column.
    return out_flat.reshape(N, Cout, H, Wpp)[:, :, :, 1:W + 1]


# ----------------------------------------------------------------------------
# Pure-JAX reference (module semantics, f32) for verification.
# ----------------------------------------------------------------------------
def _reference_forward(x_nchw, params, filter_select=None):
    eps = 1e-5
    x = jnp.transpose(x_nchw, (0, 2, 3, 1)).astype(jnp.float32)
    w1 = jnp.transpose(params["w1"], (2, 3, 1, 0))
    w2 = jnp.transpose(params["w2"], (2, 3, 1, 0))

    def conv(z, w):
        return jax.lax.conv_general_dilated(
            z, w, (1, 1), ((1, 1), (1, 1)),
            dimension_numbers=("NHWC", "HWIO", "NHWC"))

    def bn(y, g, b, m, v):
        return (y - m) / jnp.sqrt(v + eps) * g + b

    out = bn(conv(x, w1), params["bn1_gamma"], params["bn1_beta"],
             params["bn1_mean"], params["bn1_var"])
    if filter_select is not None:
        out = out * filter_select[:, 0, :][:, None, None, :]
    out = jax.nn.relu(out)
    out = bn(conv(out, w2), params["bn2_gamma"], params["bn2_beta"],
             params["bn2_mean"], params["bn2_var"])
    if filter_select is not None:
        fs2 = filter_select[:, 1, :][:, None, None, :]
        out = out * fs2 + x * fs2
    else:
        out = out + x
    out = jax.nn.relu(out)
    return jnp.transpose(out, (0, 3, 1, 2))


if __name__ == "__main__":
    key = jax.random.PRNGKey(0)
    N, C, H, W = 2, 8, 16, 16        # in_channel == out_channel, stride=1
    ks = jax.random.split(key, 12)

    x = jax.random.normal(ks[0], (N, C, H, W), jnp.float32)
    filter_select = jax.random.uniform(ks[1], (N, 2, C), jnp.float32,
                                       minval=0.0, maxval=1.0)

    params = {
        "w1": 0.2 * jax.random.normal(ks[2], (C, C, 3, 3), jnp.float32),
        "w2": 0.2 * jax.random.normal(ks[3], (C, C, 3, 3), jnp.float32),
        "bn1_gamma": 1.0 + 0.1 * jax.random.normal(ks[4], (C,), jnp.float32),
        "bn1_beta": 0.1 * jax.random.normal(ks[5], (C,), jnp.float32),
        "bn1_mean": 0.1 * jax.random.normal(ks[6], (C,), jnp.float32),
        "bn1_var": jax.random.uniform(ks[7], (C,), jnp.float32, 0.5, 1.5),
        "bn2_gamma": 1.0 + 0.1 * jax.random.normal(ks[8], (C,), jnp.float32),
        "bn2_beta": 0.1 * jax.random.normal(ks[9], (C,), jnp.float32),
        "bn2_mean": 0.1 * jax.random.normal(ks[10], (C,), jnp.float32),
        "bn2_var": jax.random.uniform(ks[11], (C,), jnp.float32, 0.5, 1.5),
    }

    # Path with filter_select (bf16 matmuls -> relaxed tolerance vs f32 ref).
    out = jax.block_until_ready(
        selected_resnet_block_forward(x, params, filter_select))
    ref = _reference_forward(x, params, filter_select)
    err = float(jnp.max(jnp.abs(out - ref)))
    scale = max(1.0, float(jnp.max(jnp.abs(ref))))
    assert out.shape == (N, C, H, W) and err <= 5e-2 * scale, \
        f"mismatch: abs={err} scale={scale}"

    # Path with filter_select=None.
    out_n = jax.block_until_ready(
        selected_resnet_block_forward(x, params, None))
    ref_n = _reference_forward(x, params, None)
    err_n = float(jnp.max(jnp.abs(out_n - ref_n)))
    scale_n = max(1.0, float(jnp.max(jnp.abs(ref_n))))
    assert err_n <= 5e-2 * scale_n, f"mismatch (None path): {err_n}"

    print("KERNEL_OK")
</pallas_src>

<mosaic_0001>
module attributes {stable_mosaic.version = 11 : i64} {
  func.func @kernel(%arg0: i32, %arg1: memref<1x8x432xbf16, #tpu.memory_space<vmem>>, %arg2: memref<8x72xbf16, #tpu.memory_space<vmem>>, %arg3: memref<8x1xf32, #tpu.memory_space<vmem>>, %arg4: memref<1x8x1xf32, #tpu.memory_space<vmem>>, %arg5: memref<8x72xbf16, #tpu.memory_space<vmem>>, %arg6: memref<8x1xf32, #tpu.memory_space<vmem>>, %arg7: memref<1x8x1xf32, #tpu.memory_space<vmem>>, %arg8: memref<1x360xf32, #tpu.memory_space<vmem>>, %arg9: memref<1x8x288xf32, #tpu.memory_space<vmem>>) attributes {dimension_semantics = [#tpu.dimension_semantics<parallel>], iteration_bounds = array<i64: 2>, scalar_prefetch = 0 : i64, scratch_operands = 0 : i64, tpu.core_type = #tpu.core_type<tc>, window_params = [{transform_indices = @transform_0, window_bounds = array<i64: 1, 8, 432>}, {pipeline_mode = #tpu.pipeline_mode<synchronous>, transform_indices = @transform_1, window_bounds = array<i64: 8, 72>}, {pipeline_mode = #tpu.pipeline_mode<synchronous>, transform_indices = @transform_2, window_bounds = array<i64: 8, 1>}, {transform_indices = @transform_3, window_bounds = array<i64: 1, 8, 1>}, {pipeline_mode = #tpu.pipeline_mode<synchronous>, transform_indices = @transform_4, window_bounds = array<i64: 8, 72>}, {pipeline_mode = #tpu.pipeline_mode<synchronous>, transform_indices = @transform_5, window_bounds = array<i64: 8, 1>}, {transform_indices = @transform_6, window_bounds = array<i64: 1, 8, 1>}, {pipeline_mode = #tpu.pipeline_mode<synchronous>, transform_indices = @transform_7, window_bounds = array<i64: 1, 360>}, {transform_indices = @transform_8, window_bounds = array<i64: 1, 8, 288>}]} {
    %c0 = arith.constant 0 : index
    %c0_0 = arith.constant 0 : index
    %c0_1 = arith.constant 0 : index
    %0 = vector.load %arg1[%c0, %c0_0, %c0_1] : memref<1x8x432xbf16, #tpu.memory_space<vmem>>, vector<1x8x432xbf16>
    %1 = vector.shape_cast %0 : vector<1x8x432xbf16> to vector<8x432xbf16>
    %2 = arith.extf %1 : vector<8x432xbf16> to vector<8x432xf32>
    %c0_2 = arith.constant 0 : index
    %c0_3 = arith.constant 0 : index
    %3 = vector.load %arg2[%c0_2, %c0_3] : memref<8x72xbf16, #tpu.memory_space<vmem>>, vector<8x72xbf16>
    %4 = vector.extract_strided_slice %2 {offsets = [0, 17], sizes = [8, 360], strides = [1, 1]} : vector<8x432xf32> to vector<8x360xf32>
    %5 = vector.extract_strided_slice %2 {offsets = [0, 18], sizes = [8, 360], strides = [1, 1]} : vector<8x432xf32> to vector<8x360xf32>
    %6 = vector.extract_strided_slice %2 {offsets = [0, 19], sizes = [8, 360], strides = [1, 1]} : vector<8x432xf32> to vector<8x360xf32>
    %7 = vector.extract_strided_slice %2 {offsets = [0, 35], sizes = [8, 360], strides = [1, 1]} : vector<8x432xf32> to vector<8x360xf32>
    %8 = vector.extract_strided_slice %2 {offsets = [0, 36], sizes = [8, 360], strides = [1, 1]} : vector<8x432xf32> to vector<8x360xf32>
    %9 = vector.extract_strided_slice %2 {offsets = [0, 37], sizes = [8, 360], strides = [1, 1]} : vector<8x432xf32> to vector<8x360xf32>
    %10 = vector.extract_strided_slice %2 {offsets = [0, 53], sizes = [8, 360], strides = [1, 1]} : vector<8x432xf32> to vector<8x360xf32>
    %11 = vector.extract_strided_slice %2 {offsets = [0, 54], sizes = [8, 360], strides = [1, 1]} : vector<8x432xf32> to vector<8x360xf32>
    %12 = vector.extract_strided_slice %2 {offsets = [0, 55], sizes = [8, 360], strides = [1, 1]} : vector<8x432xf32> to vector<8x360xf32>
    %13 = tpu.concatenate %4, %5, %6, %7, %8, %9, %10, %11, %12 in 0 : vector<8x360xf32>, vector<8x360xf32>, vector<8x360xf32>, vector<8x360xf32>, vector<8x360xf32>, vector<8x360xf32>, vector<8x360xf32>, vector<8x360xf32>, vector<8x360xf32> -> vector<72x360xf32>
    %14 = arith.truncf %13 : vector<72x360xf32> to vector<72x360xbf16>
    %cst = arith.constant dense<0.000000e+00> : vector<8x360xf32>
    %15 = tpu.matmul %3, %14, %cst {dimension_numbers = #tpu.dot_dimension_numbers<[1], [0], [0], [1], [0, 0, 1, 1], [], []>} : vector<8x72xbf16>, vector<72x360xbf16>, vector<8x360xf32> -> vector<8x360xf32>
    %c0_4 = arith.constant 0 : index
    %c0_5 = arith.constant 0 : index
    %c0_6 = arith.constant 0 : index
    %16 = vector.load %arg4[%c0_4, %c0_5, %c0_6] : memref<1x8x1xf32, #tpu.memory_space<vmem>>, vector<1x8x1xf32>
    %17 = vector.shape_cast %16 : vector<1x8x1xf32> to vector<8x1xf32>
    %c0_7 = arith.constant 0 : index
    %c0_8 = arith.constant 0 : index
    %18 = vector.load %arg3[%c0_7, %c0_8] : memref<8x1xf32, #tpu.memory_space<vmem>>, vector<8x1xf32>
    %19 = vector.broadcast %18 : vector<8x1xf32> to vector<8x360xf32>
    %20 = arith.addf %15, %19 : vector<8x360xf32>
    %21 = vector.broadcast %17 : vector<8x1xf32> to vector<8x360xf32>
    %22 = arith.mulf %21, %20 : vector<8x360xf32>
    %cst_9 = arith.constant 0.000000e+00 : f32
    %23 = vector.broadcast %cst_9 : f32 to vector<8x360xf32>
    %24 = arith.maximumf %22, %23 : vector<8x360xf32>
    %c0_10 = arith.constant 0 : index
    %c0_11 = arith.constant 0 : index
    %25 = vector.load %arg8[%c0_10, %c0_11] : memref<1x360xf32, #tpu.memory_space<vmem>>, vector<1x360xf32>
    %26 = vector.broadcast %25 : vector<1x360xf32> to vector<8x360xf32>
    %27 = arith.mulf %24, %26 : vector<8x360xf32>
    %c0_12 = arith.constant 0 : index
    %c0_13 = arith.constant 0 : index
    %28 = vector.load %arg5[%c0_12, %c0_13] : memref<8x72xbf16, #tpu.memory_space<vmem>>, vector<8x72xbf16>
    %29 = vector.extract_strided_slice %27 {offsets = [0, 17], sizes = [8, 288], strides = [1, 1]} : vector<8x360xf32> to vector<8x288xf32>
    %30 = vector.extract_strided_slice %27 {offsets = [0, 18], sizes = [8, 288], strides = [1, 1]} : vector<8x360xf32> to vector<8x288xf32>
    %31 = vector.extract_strided_slice %27 {offsets = [0, 19], sizes = [8, 288], strides = [1, 1]} : vector<8x360xf32> to vector<8x288xf32>
    %32 = vector.extract_strided_slice %27 {offsets = [0, 35], sizes = [8, 288], strides = [1, 1]} : vector<8x360xf32> to vector<8x288xf32>
    %33 = vector.extract_strided_slice %27 {offsets = [0, 36], sizes = [8, 288], strides = [1, 1]} : vector<8x360xf32> to vector<8x288xf32>
    %34 = vector.extract_strided_slice %27 {offsets = [0, 37], sizes = [8, 288], strides = [1, 1]} : vector<8x360xf32> to vector<8x288xf32>
    %35 = vector.extract_strided_slice %27 {offsets = [0, 53], sizes = [8, 288], strides = [1, 1]} : vector<8x360xf32> to vector<8x288xf32>
    %36 = vector.extract_strided_slice %27 {offsets = [0, 54], sizes = [8, 288], strides = [1, 1]} : vector<8x360xf32> to vector<8x288xf32>
    %37 = vector.extract_strided_slice %27 {offsets = [0, 55], sizes = [8, 288], strides = [1, 1]} : vector<8x360xf32> to vector<8x288xf32>
    %38 = tpu.concatenate %29, %30, %31, %32, %33, %34, %35, %36, %37 in 0 : vector<8x288xf32>, vector<8x288xf32>, vector<8x288xf32>, vector<8x288xf32>, vector<8x288xf32>, vector<8x288xf32>, vector<8x288xf32>, vector<8x288xf32>, vector<8x288xf32> -> vector<72x288xf32>
    %39 = arith.truncf %38 : vector<72x288xf32> to vector<72x288xbf16>
    %cst_14 = arith.constant dense<0.000000e+00> : vector<8x288xf32>
    %40 = tpu.matmul %28, %39, %cst_14 {dimension_numbers = #tpu.dot_dimension_numbers<[1], [0], [0], [1], [0, 0, 1, 1], [], []>} : vector<8x72xbf16>, vector<72x288xbf16>, vector<8x288xf32> -> vector<8x288xf32>
    %41 = vector.extract_strided_slice %2 {offsets = [0, 72], sizes = [8, 288], strides = [1, 1]} : vector<8x432xf32> to vector<8x288xf32>
    %c0_15 = arith.constant 0 : index
    %c0_16 = arith.constant 0 : index
    %c0_17 = arith.constant 0 : index
    %42 = vector.load %arg7[%c0_15, %c0_16, %c0_17] : memref<1x8x1xf32, #tpu.memory_space<vmem>>, vector<1x8x1xf32>
    %43 = vector.shape_cast %42 : vector<1x8x1xf32> to vector<8x1xf32>
    %c0_18 = arith.constant 0 : index
    %c0_19 = arith.constant 0 : index
    %44 = vector.load %arg6[%c0_18, %c0_19] : memref<8x1xf32, #tpu.memory_space<vmem>>, vector<8x1xf32>
    %45 = vector.broadcast %44 : vector<8x1xf32> to vector<8x288xf32>
    %46 = arith.addf %40, %45 : vector<8x288xf32>
    %47 = arith.addf %46, %41 : vector<8x288xf32>
    %48 = vector.broadcast %43 : vector<8x1xf32> to vector<8x288xf32>
    %49 = arith.mulf %48, %47 : vector<8x288xf32>
    %cst_20 = arith.constant 0.000000e+00 : f32
    %50 = vector.broadcast %cst_20 : f32 to vector<8x288xf32>
    %51 = arith.maximumf %49, %50 : vector<8x288xf32>
    %c0_21 = arith.constant 0 : index
    %c0_22 = arith.constant 0 : index
    %c0_23 = arith.constant 0 : index
    %52 = vector.load %arg9[%c0_21, %c0_22, %c0_23] : memref<1x8x288xf32, #tpu.memory_space<vmem>>, vector<1x8x288xf32>
    %53 = vector.shape_cast %52 : vector<1x8x288xf32> to vector<8x288xf32>
    %54 = vector.shape_cast %51 : vector<8x288xf32> to vector<1x8x288xf32>
    tpu.vector_store %arg9[%c0_21, %c0_22, %c0_23], %54 {strides = array<i32>} : memref<1x8x288xf32, #tpu.memory_space<vmem>>, vector<1x8x288xf32>,
    return
  }
  func.func @transform_0(%arg0: i32) -> (i32, i32, i32) {
    %c0_i32 = arith.constant 0 : i32
    %c0_i32_0 = arith.constant 0 : i32
    %c0_i32_1 = arith.constant 0 : i32
    return %arg0, %c0_i32, %c0_i32_0 : i32, i32, i32
  }
  func.func @transform_1(%arg0: i32) -> (i32, i32) {
    %c0_i32 = arith.constant 0 : i32
    %c0_i32_0 = arith.constant 0 : i32
    %c0_i32_1 = arith.constant 0 : i32
    return %c0_i32, %c0_i32_0 : i32, i32
  }
  func.func @transform_2(%arg0: i32) -> (i32, i32) {
    %c0_i32 = arith.constant 0 : i32
    %c0_i32_0 = arith.constant 0 : i32
    %c0_i32_1 = arith.constant 0 : i32
    return %c0_i32, %c0_i32_0 : i32, i32
  }
  func.func @transform_3(%arg0: i32) -> (i32, i32, i32) {
    %c0_i32 = arith.constant 0 : i32
    %c0_i32_0 = arith.constant 0 : i32
    %c0_i32_1 = arith.constant 0 : i32
    return %arg0, %c0_i32, %c0_i32_0 : i32, i32, i32
  }
  func.func @transform_4(%arg0: i32) -> (i32, i32) {
    %c0_i32 = arith.constant 0 : i32
    %c0_i32_0 = arith.constant 0 : i32
    %c0_i32_1 = arith.constant 0 : i32
    return %c0_i32, %c0_i32_0 : i32, i32
  }
  func.func @transform_5(%arg0: i32) -> (i32, i32) {
    %c0_i32 = arith.constant 0 : i32
    %c0_i32_0 = arith.constant 0 : i32
    %c0_i32_1 = arith.constant 0 : i32
    return %c0_i32, %c0_i32_0 : i32, i32
  }
  func.func @transform_6(%arg0: i32) -> (i32, i32, i32) {
    %c0_i32 = arith.constant 0 : i32
    %c0_i32_0 = arith.constant 0 : i32
    %c0_i32_1 = arith.constant 0 : i32
    return %arg0, %c0_i32, %c0_i32_0 : i32, i32, i32
  }
  func.func @transform_7(%arg0: i32) -> (i32, i32) {
    %c0_i32 = arith.constant 0 : i32
    %c0_i32_0 = arith.constant 0 : i32
    %c0_i32_1 = arith.constant 0 : i32
    return %c0_i32, %c0_i32_0 : i32, i32
  }
  func.func @transform_8(%arg0: i32) -> (i32, i32, i32) {
    %c0_i32 = arith.constant 0 : i32
    %c0_i32_0 = arith.constant 0 : i32
    %c0_i32_1 = arith.constant 0 : i32
    return %arg0, %c0_i32, %c0_i32_0 : i32, i32, i32
  }
}

</mosaic_0001>

<llo_original>
// kernel: tpu_custom_call.1
$region0: #{tpu_custom_call.1}
  #allocation0 [shape = 'u32[]', space=smem, size = 0x4, offset = 0x4, fixed_abs, tag = 'smem constant byte address 0x4 - core index']
  #allocation1 [shape = 'u32[144,128]{1,0:T(1,128)}', space=vmem, size = 0x12000, scoped, tag = 'internal scratch']
  %s0 = inlined_call_operand.vmem [shape: bf16[2,8,432], index: 0, kind: input, shape index: {}]
  %s1 = inlined_call_operand.vmem [shape: bf16[8,72], index: 1, kind: input, shape index: {}]
  %s2 = inlined_call_operand.vmem [shape: f32[8,1], index: 2, kind: input, shape index: {}]
  %s3 = inlined_call_operand.vmem [shape: f32[2,8,1], index: 3, kind: input, shape index: {}]
  %s4 = inlined_call_operand.vmem [shape: bf16[8,72], index: 4, kind: input, shape index: {}]
  %s5 = inlined_call_operand.vmem [shape: f32[8,1], index: 5, kind: input, shape index: {}]
  %s6 = inlined_call_operand.vmem [shape: f32[2,8,1], index: 6, kind: input, shape index: {}]
  %s7 = inlined_call_operand.vmem [shape: f32[1,360], index: 7, kind: input, shape index: {}]
  %s8 = inlined_call_operand.hbm [shape: f32[2,8,288], index: 8, kind: output, shape index: {}]
  %s9 = sld [smem:[#allocation0]]
  $region65: #{tpu_custom_call.1} parent=0
    _
  %s11 = ssub.s32 1, %s9
  %s12 = scalar_select 0, %s11, %s9
  $region1: #{tpu_custom_call.1} parent=0
    #allocation2 [shape = 'u8[24576]{0}', space=vmem, size = 0x6000, scoped, tag = 'output window, operand 0']
    #allocation3 [shape = 's32[2]{0}', space=sflag, size = 0x8, scoped, tag = 'scoped memory for tpu_custom_call.1']
    %13 = vsyncpa [#allocation3], 0
    %s14 = scalar_lea.sflag [#allocation3], 1
    %15 = vsyncpa %s14, 0
    loop: start=0, step=1, limit=4
    $region2: #{tpu_custom_call.1} parent=1 // loop_pre_header
      _
    $region3: #{tpu_custom_call.1} parent=1 // loop_header
      %s17 = sphi 0, %s21
      %p18 = scmp.ge.s32.totalorder %s17, 4
      %s27 = sphi 0, %s29
      %s30 = sphi 0, %s27
      %s31 = sphi 0, %s30
      %s47 = sphi 0, %s31
      %s51 = sphi 0, %s51
      %s53 = sphi 0, %s51
      %s54 = sphi 0, %s53
      %s68 = sphi 0, %s54
      %s72 = sphi 0, %s72
      %s74 = sphi 0, %s72
      %s75 = sphi 0, %s74
      %s89 = sphi 0, %s75
      %s95 = sphi 0, %s97
      %s98 = sphi 0, %s95
      %s99 = sphi 0, %s98
      %s115 = sphi 0, %s99
      %s119 = sphi 0, %s119
      %s121 = sphi 0, %s119
      %s122 = sphi 0, %s121
      %s136 = sphi 0, %s122
      %s140 = sphi 0, %s140
      %s142 = sphi 0, %s140
      %s143 = sphi 0, %s142
      %s157 = sphi 0, %s143
      %s163 = sphi 0, %s165
      %s166 = sphi 0, %s163
      %s167 = sphi 0, %s166
      %s183 = sphi 0, %s167
      %s187 = sphi 0, %s187
      %s189 = sphi 0, %s187
      %s190 = sphi 0, %s189
      %s204 = sphi 0, %s190
      %s210 = sphi 0, %s212
      %s213 = sphi 0, %s210
      %s214 = sphi 0, %s213
      %s230 = sphi 0, %s214
    $region4: #{tpu_custom_call.1} parent=1 // loop_header_branch
      %20 = sbr.rel (%p18) target = $region8
    $region5: #{tpu_custom_call.1} parent=1 // loop_body
      %s22 = ssub.s32 %s17, 1
      %s23 = ssub.s32 %s17, 2
      %s24 = sadd.s32 %s17, 1
      %s25 = ssub.s32 %s17, %s24
      %p26 = scmp.eq.s32.totalorder %s25, 0
      %s28 = sadd.s32 %s27, 1
      %s29 = scalar_select %p26, %s27, %s28
      %p32 = pneg %p26
      %p33 = scmp.eq.s32.totalorder %s17, 1
      %p34 = por %p32, %p33
      %p35 = scmp.ne.s32.totalorder %s27, %s30
      %p36 = scmp.eq.s32.totalorder %s17, 0
      %p37 = por %p35, %p36
      %p38 = scmp.ne.s32.totalorder %s27, %s30
      %p39 = scmp.eq.s32.totalorder %s22, 1
      %p40 = por %p38, %p39
      %p41 = scmp.ne.s32.totalorder %s30, %s31
      %p42 = scmp.eq.s32.totalorder %s22, 0
      %p43 = por %p41, %p42
      %p44 = scmp.ne.s32.totalorder %s30, %s31
      %p45 = scmp.eq.s32.totalorder %s23, 1
      %p46 = por %p44, %p45
      %p48 = scmp.ne.s32.totalorder %s31, %s47
      %p49 = scmp.eq.s32.totalorder %s23, 0
      %p50 = por %p48, %p49
      %s52 = sadd.s32 %s51, 1
      %p55 = scmp.eq.s32.totalorder %s17, 1
      %p56 = scmp.ne.s32.totalorder %s51, %s53
      %p57 = scmp.eq.s32.totalorder %s17, 0
      %p58 = por %p56, %p57
      %p59 = scmp.ne.s32.totalorder %s51, %s53
      %p60 = scmp.eq.s32.totalorder %s22, 1
      %p61 = por %p59, %p60
      %p62 = scmp.ne.s32.totalorder %s53, %s54
      %p63 = scmp.eq.s32.totalorder %s22, 0
      %p64 = por %p62, %p63
      %p65 = scmp.ne.s32.totalorder %s53, %s54
      %p66 = scmp.eq.s32.totalorder %s23, 1
      %p67 = por %p65, %p66
      %p69 = scmp.ne.s32.totalorder %s54, %s68
      %p70 = scmp.eq.s32.totalorder %s23, 0
      %p71 = por %p69, %p70
      %s73 = sadd.s32 %s72, 1
      %p76 = scmp.eq.s32.totalorder %s17, 1
      %p77 = scmp.ne.s32.totalorder %s72, %s74
      %p78 = scmp.eq.s32.totalorder %s17, 0
      %p79 = por %p77, %p78
      %p80 = scmp.ne.s32.totalorder %s72, %s74
      %p81 = scmp.eq.s32.totalorder %s22, 1
      %p82 = por %p80, %p81
      %p83 = scmp.ne.s32.totalorder %s74, %s75
      %p84 = scmp.eq.s32.totalorder %s22, 0
      %p85 = por %p83, %p84
      %p86 = scmp.ne.s32.totalorder %s74, %s75
      %p87 = scmp.eq.s32.totalorder %s23, 1
      %p88 = por %p86, %p87
      %p90 = scmp.ne.s32.totalorder %s75, %s89
      %p91 = scmp.eq.s32.totalorder %s23, 0
      %p92 = por %p90, %p91
      %s93 = ssub.s32 %s17, %s24
      %p94 = scmp.eq.s32.totalorder %s93, 0
      %s96 = sadd.s32 %s95, 1
      %s97 = scalar_select %p94, %s95, %s96
      %p100 = pneg %p94
      %p101 = scmp.eq.s32.totalorder %s17, 1
      %p102 = por %p100, %p101
      %p103 = scmp.ne.s32.totalorder %s95, %s98
      %p104 = scmp.eq.s32.totalorder %s17, 0
      %p105 = por %p103, %p104
      %p106 = scmp.ne.s32.totalorder %s95, %s98
      %p107 = scmp.eq.s32.totalorder %s22, 1
      %p108 = por %p106, %p107
      %p109 = scmp.ne.s32.totalorder %s98, %s99
      %p110 = scmp.eq.s32.totalorder %s22, 0
      %p111 = por %p109, %p110
      %p112 = scmp.ne.s32.totalorder %s98, %s99
      %p113 = scmp.eq.s32.totalorder %s23, 1
      %p114 = por %p112, %p113
      %p116 = scmp.ne.s32.totalorder %s99, %s115
      %p117 = scmp.eq.s32.totalorder %s23, 0
      %p118 = por %p116, %p117
      %s120 = sadd.s32 %s119, 1
      %p123 = scmp.eq.s32.totalorder %s17, 1
      %p124 = scmp.ne.s32.totalorder %s119, %s121
      %p125 = scmp.eq.s32.totalorder %s17, 0
      %p126 = por %p124, %p125
      %p127 = scmp.ne.s32.totalorder %s119, %s121
      %p128 = scmp.eq.s32.totalorder %s22, 1
      %p129 = por %p127, %p128
      %p130 = scmp.ne.s32.totalorder %s121, %s122
      %p131 = scmp.eq.s32.totalorder %s22, 0
      %p132 = por %p130, %p131
      %p133 = scmp.ne.s32.totalorder %s121, %s122
      %p134 = scmp.eq.s32.totalorder %s23, 1
      %p135 = por %p133, %p134
      %p137 = scmp.ne.s32.totalorder %s122, %s136
      %p138 = scmp.eq.s32.totalorder %s23, 0
      %p139 = por %p137, %p138
      %s141 = sadd.s32 %s140, 1
      %p144 = scmp.eq.s32.totalorder %s17, 1
      %p145 = scmp.ne.s32.totalorder %s140, %s142
      %p146 = scmp.eq.s32.totalorder %s17, 0
      %p147 = por %p145, %p146
      %p148 = scmp.ne.s32.totalorder %s140, %s142
      %p149 = scmp.eq.s32.totalorder %s22, 1
      %p150 = por %p148, %p149
      %p151 = scmp.ne.s32.totalorder %s142, %s143
      %p152 = scmp.eq.s32.totalorder %s22, 0
      %p153 = por %p151, %p152
      %p154 = scmp.ne.s32.totalorder %s142, %s143
      %p155 = scmp.eq.s32.totalorder %s23, 1
      %p156 = por %p154, %p155
      %p158 = scmp.ne.s32.totalorder %s143, %s157
      %p159 = scmp.eq.s32.totalorder %s23, 0
      %p160 = por %p158, %p159
      %s161 = ssub.s32 %s17, %s24
      %p162 = scmp.eq.s32.totalorder %s161, 0
      %s164 = sadd.s32 %s163, 1
      %s165 = scalar_select %p162, %s163, %s164
      %p168 = pneg %p162
      %p169 = scmp.eq.s32.totalorder %s17, 1
      %p170 = por %p168, %p169
      %p171 = scmp.ne.s32.totalorder %s163, %s166
      %p172 = scmp.eq.s32.totalorder %s17, 0
      %p173 = por %p171, %p172
      %p174 = scmp.ne.s32.totalorder %s163, %s166
      %p175 = scmp.eq.s32.totalorder %s22, 1
      %p176 = por %p174, %p175
      %p177 = scmp.ne.s32.totalorder %s166, %s167
      %p178 = scmp.eq.s32.totalorder %s22, 0
      %p179 = por %p177, %p178
      %p180 = scmp.ne.s32.totalorder %s166, %s167
      %p181 = scmp.eq.s32.totalorder %s23, 1
      %p182 = por %p180, %p181
      %p184 = scmp.ne.s32.totalorder %s167, %s183
      %p185 = scmp.eq.s32.totalorder %s23, 0
      %p186 = por %p184, %p185
      %s188 = sadd.s32 %s187, 1
      %p191 = scmp.eq.s32.totalorder %s17, 1
      %p192 = scmp.ne.s32.totalorder %s187, %s189
      %p193 = scmp.eq.s32.totalorder %s17, 0
      %p194 = por %p192, %p193
      %p195 = scmp.ne.s32.totalorder %s187, %s189
      %p196 = scmp.eq.s32.totalorder %s22, 1
      %p197 = por %p195, %p196
      %p198 = scmp.ne.s32.totalorder %s189, %s190
      %p199 = scmp.eq.s32.totalorder %s22, 0
      %p200 = por %p198, %p199
      %p201 = scmp.ne.s32.totalorder %s189, %s190
      %p202 = scmp.eq.s32.totalorder %s23, 1
      %p203 = por %p201, %p202
      %p205 = scmp.ne.s32.totalorder %s190, %s204
      %p206 = scmp.eq.s32.totalorder %s23, 0
      %p207 = por %p205, %p206
      %s208 = ssub.s32 %s17, %s24
      %p209 = scmp.eq.s32.totalorder %s208, 0
      %s211 = sadd.s32 %s210, 1
      %s212 = scalar_select %p209, %s210, %s211
      %p215 = pneg %p209
      %p216 = scmp.eq.s32.totalorder %s17, 1
      %p217 = por %p215, %p216
      %p218 = scmp.ne.s32.totalorder %s210, %s213
      %p219 = scmp.eq.s32.totalorder %s17, 0
      %p220 = por %p218, %p219
      %p221 = scmp.ne.s32.totalorder %s210, %s213
      %p222 = scmp.eq.s32.totalorder %s22, 1
      %p223 = por %p221, %p222
      %p224 = scmp.ne.s32.totalorder %s213, %s214
      %p225 = scmp.eq.s32.totalorder %s22, 0
      %p226 = por %p224, %p225
      %p227 = scmp.ne.s32.totalorder %s213, %s214
      %p228 = scmp.eq.s32.totalorder %s23, 1
      %p229 = por %p227, %p228
      %p231 = scmp.ne.s32.totalorder %s214, %s230
      %p232 = scmp.eq.s32.totalorder %s23, 0
      %p233 = por %p231, %p232
      %p234 = scmp.le.s32.totalorder 1, %s17
      %p235 = scmp.lt.s32.totalorder %s17, 3
      %p236 = pnand %p234, %p235
      %p237 = pneg %p236
      // Predicated region
      $region9: #{tpu_custom_call.1} parent=5 // pred_check
        _
      $region10: #{tpu_custom_call.1} parent=5 // pred_check_branch
        %239 = sbr.rel (%p236) target = $region12
      $region11: #{tpu_custom_call.1} parent=5 // pred_region
        %s240 = ssub.s32 %s17, 1
        // Predicated region
        $region13: #{tpu_custom_call.1} parent=11 // pred_check
          %p241 = pneg %p64
        $region14: #{tpu_custom_call.1} parent=11 // pred_check_branch
          %243 = sbr.rel (%p241) target = $region16
        $region15: #{tpu_custom_call.1} parent=11 // pred_region
          _
        $region16: #{tpu_custom_call.1} parent=11 // pred_fallthru
          _
        // Predicated region
        $region17: #{tpu_custom_call.1} parent=11 // pred_check
          %p244 = pneg %p85
        $region18: #{tpu_custom_call.1} parent=11 // pred_check_branch
          %246 = sbr.rel (%p244) target = $region20
        $region19: #{tpu_custom_call.1} parent=11 // pred_region
          _
        $region20: #{tpu_custom_call.1} parent=11 // pred_fallthru
          _
        // Predicated region
        $region21: #{tpu_custom_call.1} parent=11 // pred_check
          %p247 = pneg %p132
        $region22: #{tpu_custom_call.1} parent=11 // pred_check_branch
          %249 = sbr.rel (%p247) target = $region24
        $region23: #{tpu_custom_call.1} parent=11 // pred_region
          _
        $region24: #{tpu_custom_call.1} parent=11 // pred_fallthru
          _
        // Predicated region
        $region25: #{tpu_custom_call.1} parent=11 // pred_check
          %p250 = pneg %p153
        $region26: #{tpu_custom_call.1} parent=11 // pred_check_branch
          %252 = sbr.rel (%p250) target = $region28
        $region27: #{tpu_custom_call.1} parent=11 // pred_region
          _
        $region28: #{tpu_custom_call.1} parent=11 // pred_fallthru
          _
        // Predicated region
        $region29: #{tpu_custom_call.1} parent=11 // pred_check
          %p253 = pneg %p200
        $region30: #{tpu_custom_call.1} parent=11 // pred_check_branch
          %255 = sbr.rel (%p253) target = $region32
        $region31: #{tpu_custom_call.1} parent=11 // pred_region
          _
        $region32: #{tpu_custom_call.1} parent=11 // pred_fallthru
          _
      $region12: #{tpu_custom_call.1} parent=5 // pred_fallthru
        _
      %p256 = scmp.lt.s32.totalorder %s17, 2
      // Predicated region
      $region33: #{tpu_custom_call.1} parent=5 // pred_check
        %p257 = pneg %p256
      $region34: #{tpu_custom_call.1} parent=5 // pred_check_branch
        %259 = sbr.rel (%p257) target = $region36
      $region35: #{tpu_custom_call.1} parent=5 // pred_region
        // Predicated region
        $region37: #{tpu_custom_call.1} parent=35 // pred_check
          %p260 = pneg %p37
        $region38: #{tpu_custom_call.1} parent=35 // pred_check_branch
          %262 = sbr.rel (%p260) target = $region40
        $region39: #{tpu_custom_call.1} parent=35 // pred_region
          %p263 = scmp.lt.s32.totalorder %s17, 1
          %s264 = scalar_select %p263, %s17, 1
          %s265 = smul.addr %s264, 4
          %s266 = smul.addr %s265, 4
          %s267 = scalar_lea.vmem %s0, %s266
        $region40: #{tpu_custom_call.1} parent=35 // pred_fallthru
          _
        // Predicated region
        $region41: #{tpu_custom_call.1} parent=35 // pred_check
          %p268 = pneg %p105
        $region42: #{tpu_custom_call.1} parent=35 // pred_check_branch
          %270 = sbr.rel (%p268) target = $region44
        $region43: #{tpu_custom_call.1} parent=35 // pred_region
          %p271 = scmp.lt.s32.totalorder %s17, 1
          %s272 = scalar_select %p271, %s17, 1
          %s273 = smul.addr %s272, 8
          %s274 = scalar_lea.vmem %s3, %s273
        $region44: #{tpu_custom_call.1} parent=35 // pred_fallthru
          _
        // Predicated region
        $region45: #{tpu_custom_call.1} parent=35 // pred_check
          %p275 = pneg %p173
        $region46: #{tpu_custom_call.1} parent=35 // pred_check_branch
          %277 = sbr.rel (%p275) target = $region48
        $region47: #{tpu_custom_call.1} parent=35 // pred_region
          %p278 = scmp.lt.s32.totalorder %s17, 1
          %s279 = scalar_select %p278, %s17, 1
          %s280 = smul.addr %s279, 8
          %s281 = scalar_lea.vmem %s6, %s280
        $region48: #{tpu_custom_call.1} parent=35 // pred_fallthru
          _
      $region36: #{tpu_custom_call.1} parent=5 // pred_fallthru
        _
      %p282 = scmp.le.s32.totalorder 1, %s17
      %p283 = scmp.lt.s32.totalorder %s17, 3
      %p284 = pnand %p282, %p283
      %p285 = pneg %p284
      // Predicated region
      $region49: #{tpu_custom_call.1} parent=5 // pred_check
        _
      $region50: #{tpu_custom_call.1} parent=5 // pred_check_branch
        %287 = sbr.rel (%p284) target = $region52
      $region51: #{tpu_custom_call.1} parent=5 // pred_region
        %s288 = ssub.s32 %s17, 1
        %p289 = scmp.lt.s32.totalorder %s22, 1
        %s290 = scalar_select %p289, %s22, 1
        %s291 = smul.addr %s290, 4
        %s292 = smul.addr %s291, 4
        %s293 = scalar_lea.vmem %s0, %s292
        %p294 = pneg %p43
        %p295 = pneg %p40
        %p296 = pneg %p64
        %p297 = pneg %p61
        %p298 = pneg %p85
        %p299 = pneg %p82
        %p300 = scmp.lt.s32.totalorder %s22, 1
        %s301 = scalar_select %p300, %s22, 1
        %s302 = smul.addr %s301, 8
        %s303 = scalar_lea.vmem %s3, %s302
        %p304 = pneg %p111
        %p305 = pneg %p108
        %p306 = pneg %p132
        %p307 = pneg %p129
        %p308 = pneg %p153
        %p309 = pneg %p150
        %p310 = scmp.lt.s32.totalorder %s22, 1
        %s311 = scalar_select %p310, %s22, 1
        %s312 = smul.addr %s311, 8
        %s313 = scalar_lea.vmem %s6, %s312
        %p314 = pneg %p179
        %p315 = pneg %p176
        %p316 = pneg %p200
        %p317 = pneg %p197
        %p318 = pneg %p226
        %p319 = pneg %p223
        %s320 = sand.u32 %s213, 1
        %s321 = scalar_lea.sflag [#allocation3], %s320
        %s322 = sand.u32 %s213, 1
        %s323 = smul.addr %s322, 24
        %s324 = scalar_lea.vmem [#allocation2], %s323
        %p325 = scmp.lt.s32.totalorder %s22, 1
        %s326 = scalar_select %p325, %s22, 1
        %s327 = smul.addr %s326, 4
        %s328 = smul.addr %s327, 4
        %s329 = scalar_lea.vmem %s0, %s328
        %p330 = scmp.lt.s32.totalorder %s22, 1
        %s331 = scalar_select %p330, %s22, 1
        %s332 = smul.addr %s331, 8
        %s333 = scalar_lea.vmem %s3, %s332
        %p334 = scmp.lt.s32.totalorder %s22, 1
        %s335 = scalar_select %p334, %s22, 1
        %s336 = smul.addr %s335, 8
        %s337 = scalar_lea.vmem %s6, %s336
        %v339 = vld [vmem:[%s329] sm:$0xff]
        %v340 = vld [vmem:[%s329 + $0x8] sm:$0xff]
        %v341 = vunpack.c.l.bf16 %v339
        %v342 = vunpack.c.h.bf16 %v339
        %v343 = vunpack.c.l.bf16 %v340
        %v344 = vunpack.c.h.bf16 %v340
        %v345 = vld [vmem:[%s1] sm:$0xf]
        %349 = vrot.lane.b32.xlu0 %v341, 127
        %v350 = vpop.permute.xlu0 %349
        %351 = vrot.lane.b32.xlu0 %v342, 127
        %v352 = vpop.permute.xlu0 %351
        %353 = vrot.lane.b32.xlu0 %v343, 127
        %v354 = vpop.permute.xlu0 %353
        %vm355 = vcmask 1039360
        %v356 = vsel %vm355, %v350, %v352
        %v357 = vsel %vm355, %v352, %v354
        %361 = vrot.lane.b32.xlu0 %v341, 126
        %v362 = vpop.permute.xlu0 %361
        %363 = vrot.lane.b32.xlu0 %v342, 126
        %v364 = vpop.permute.xlu0 %363
        %365 = vrot.lane.b32.xlu0 %v343, 126
        %v366 = vpop.permute.xlu0 %365
        %vm367 = vcmask 1031168
        %v368 = vsel %vm367, %v362, %v364
        %v369 = vsel %vm367, %v364, %v366
        %374 = vrot.lane.b32.xlu0 %v341, 110
        %v375 = vpop.permute.xlu0 %374
        %376 = vrot.lane.b32.xlu0 %v342, 110
        %v377 = vpop.permute.xlu0 %376
        %378 = vrot.lane.b32.xlu0 %v343, 110
        %v379 = vpop.permute.xlu0 %378
        %380 = vrot.lane.b32.xlu0 %v344, 110
        %v381 = vpop.permute.xlu0 %380
        %vm382 = vcmask 900096
        %v383 = vsel %vm382, %v375, %v377
        %v384 = vsel %vm382, %v377, %v379
        %v385 = vsel %vm382, %v379, %v381
        %389 = vrot.lane.b32.xlu0 %v341, 109
        %v390 = vpop.permute.xlu0 %389
        %391 = vrot.lane.b32.xlu0 %v342, 109
        %v392 = vpop.permute.xlu0 %391
        %393 = vrot.lane.b32.xlu0 %v343, 109
        %v394 = vpop.permute.xlu0 %393
        %395 = vrot.lane.b32.xlu0 %v344, 109
        %v396 = vpop.permute.xlu0 %395
        %vm397 = vcmask 891904
        %v398 = vsel %vm397, %v390, %v392
        %v399 = vsel %vm397, %v392, %v394
        %v400 = vsel %vm397, %v394, %v396
        %404 = vrot.lane.b32.xlu0 %v341, 108
        %v405 = vpop.permute.xlu0 %404
        %406 = vrot.lane.b32.xlu0 %v342, 108
        %v407 = vpop.permute.xlu0 %406
        %408 = vrot.lane.b32.xlu0 %v343, 108
        %v409 = vpop.permute.xlu0 %408
        %410 = vrot.lane.b32.xlu0 %v344, 108
        %v411 = vpop.permute.xlu0 %410
        %vm412 = vcmask 883712
        %v413 = vsel %vm412, %v405, %v407
        %v414 = vsel %vm412, %v407, %v409
        %v415 = vsel %vm412, %v409, %v411
        %419 = vrot.lane.b32.xlu0 %v341, 92
        %v420 = vpop.permute.xlu0 %419
        %421 = vrot.lane.b32.xlu0 %v342, 92
        %v422 = vpop.permute.xlu0 %421
        %423 = vrot.lane.b32.xlu0 %v343, 92
        %v424 = vpop.permute.xlu0 %423
        %425 = vrot.lane.b32.xlu0 %v344, 92
        %v426 = vpop.permute.xlu0 %425
        %vm427 = vcmask 752640
        %v428 = vsel %vm427, %v420, %v422
        %v429 = vsel %vm427, %v422, %v424
        %v430 = vsel %vm427, %v424, %v426
        %434 = vrot.lane.b32.xlu0 %v341, 91
        %v435 = vpop.permute.xlu0 %434
        %436 = vrot.lane.b32.xlu0 %v342, 91
        %v437 = vpop.permute.xlu0 %436
        %438 = vrot.lane.b32.xlu0 %v343, 91
        %v439 = vpop.permute.xlu0 %438
        %440 = vrot.lane.b32.xlu0 %v344, 91
        %v441 = vpop.permute.xlu0 %440
        %vm442 = vcmask 744448
        %v443 = vsel %vm442, %v435, %v437
        %v444 = vsel %vm442, %v437, %v439
        %v445 = vsel %vm442, %v439, %v441
        %449 = vrot.lane.b32.xlu0 %v341, 90
        %v450 = vpop.permute.xlu0 %449
        %451 = vrot.lane.b32.xlu0 %v342, 90
        %v452 = vpop.permute.xlu0 %451
        %453 = vrot.lane.b32.xlu0 %v343, 90
        %v454 = vpop.permute.xlu0 %453
        %455 = vrot.lane.b32.xlu0 %v344, 90
        %v456 = vpop.permute.xlu0 %455
        %vm457 = vcmask 736256
        %v458 = vsel %vm457, %v450, %v452
        %v459 = vsel %vm457, %v452, %v454
        %v460 = vsel %vm457, %v454, %v456
        %v464 = vpack.c.bf16 %v356, %v341
        %v465 = vpack.c.bf16 %v357, %v342
        %v466 = vpack.c.bf16 %v354, %v343
        %v467 = vpack.c.bf16 %v383, %v368
        %v468 = vpack.c.bf16 %v384, %v369
        %v469 = vpack.c.bf16 %v385, %v366
        %v470 = vpack.c.bf16 %v413, %v398
        %v471 = vpack.c.bf16 %v414, %v399
        %v472 = vpack.c.bf16 %v415, %v400
        %v473 = vpack.c.bf16 %v443, %v428
        %v474 = vpack.c.bf16 %v444, %v429
        %v475 = vpack.c.bf16 %v445, %v430
        %v476 = vpack.c.bf16 %v458, %v458
        %v477 = vpack.c.bf16 %v459, %v459
        %v478 = vpack.c.bf16 %v460, %v460
        %v479 = vld [vmem:[%s333] sm:$0xff]
        %v480 = vld [vmem:[%s2] sm:$0xff]
        %482 = vset.pattern.permute.xlu0 0
        %483 = vperm.xlu0 %482, %v480
        %v484 = vpop.permute.xlu0 %483
        %501 = vrot.lane.b32.xlu0 %v464, 111
        %v502 = vpop.permute.xlu0 %501
        %503 = vrot.lane.b32.xlu0 %v465, 111
        %v504 = vpop.permute.xlu0 %503
        %505 = vrot.lane.b32.xlu0 %v466, 111
        %v506 = vpop.permute.xlu0 %505
        %507 = vrot.lane.b32.xlu0 %v467, 111
        %v508 = vpop.permute.xlu0 %507
        %509 = vrot.lane.b32.xlu0 %v468, 111
        %v510 = vpop.permute.xlu0 %509
        %511 = vrot.lane.b32.xlu0 %v469, 111
        %v512 = vpop.permute.xlu0 %511
        %513 = vrot.lane.b32.xlu0 %v470, 111
        %v514 = vpop.permute.xlu0 %513
        %515 = vrot.lane.b32.xlu0 %v471, 111
        %v516 = vpop.permute.xlu0 %515
        %517 = vrot.lane.b32.xlu0 %v472, 111
        %v518 = vpop.permute.xlu0 %517
        %519 = vrot.lane.b32.xlu0 %v473, 111
        %v520 = vpop.permute.xlu0 %519
        %521 = vrot.lane.b32.xlu0 %v474, 111
        %v522 = vpop.permute.xlu0 %521
        %523 = vrot.lane.b32.xlu0 %v475, 111
        %v524 = vpop.permute.xlu0 %523
        %525 = vrot.lane.b32.xlu0 %v476, 111
        %v526 = vpop.permute.xlu0 %525
        %527 = vrot.lane.b32.xlu0 %v477, 111
        %v528 = vpop.permute.xlu0 %527
        %529 = vrot.lane.b32.xlu0 %v478, 111
        %v530 = vpop.permute.xlu0 %529
        %vm531 = vcmask 908288
        %v532 = vsel %vm531, %v502, %v504
        %v533 = vsel %vm531, %v504, %v506
        %v534 = vsel %vm531, %v508, %v510
        %v535 = vsel %vm531, %v510, %v512
        %v536 = vsel %vm531, %v514, %v516
        %v537 = vsel %vm531, %v516, %v518
        %v538 = vsel %vm531, %v520, %v522
        %v539 = vsel %vm531, %v522, %v524
        %v540 = vsel %vm531, %v526, %v528
        %v541 = vsel %vm531, %v528, %v530
        %vm554 = vcmask 588800
        %v556 = vsel %vm554, %v345, 0
        %vm558 = vcmask 1043456
        %v560 = vsel %vm558, %v540, 0
        %v563 = vsel %vm558, %v541, 0
        %v566 = vsel %vm558, %v530, 0
        %568 = vmatprep.subr.bf16.mxu0 0
        %569 = vmatpush1.bf16.msra.mxu0 0
        %570 = vmatprep.subr.bf16.mxu0 0
        %571 = vmatpush1.bf16.msra.mxu0 0
        %572 = vmatprep.subr.bf16.mxu0 0
        %573 = vmatpush1.bf16.msra.mxu0 0
        %574 = vmatprep.subr.bf16.mxu0 %v563
        %575 = vmatpush1.bf16.msra.mxu0 %v560
        %576 = vmatprep.subr.bf16.mxu0 %v539
        %577 = vmatpush1.bf16.msra.mxu0 %v538
        %578 = vmatprep.subr.bf16.mxu0 %v537
        %579 = vmatpush1.bf16.msra.mxu0 %v536
        %580 = vmatprep.subr.bf16.mxu0 %v535
        %581 = vmatpush1.bf16.msra.mxu0 %v534
        %582 = vmatprep.subr.bf16.mxu0 %v533
        %583 = vmatpush1.bf16.msra.mxu0 %v532
        %584 = vmatprep.subr.bf16.mxu0 0
        %585 = vmatpush2.bf16.msra.mxu0 0
        %586 = vmatprep.subr.bf16.mxu0 0
        %587 = vmatpush2.bf16.msra.mxu0 0
        %588 = vmatprep.subr.bf16.mxu0 0
        %589 = vmatpush2.bf16.msra.mxu0 0
        %590 = vmatprep.subr.bf16.mxu0 0
        %591 = vmatpush2.bf16.msra.mxu0 0
        %592 = vmatprep.subr.bf16.mxu0 0
        %593 = vmatpush2.bf16.msra.mxu0 0
        %594 = vmatprep.subr.bf16.mxu0 0
        %595 = vmatpush2.bf16.msra.mxu0 0
        %596 = vmatprep.subr.bf16.mxu0 0
        %597 = vmatpush2.bf16.msra.mxu0 0
        %598 = vmatprep.subr.bf16.mxu0 0
        %599 = vmatpush2.bf16.msra.mxu0 0
        %600 = vmatprep.mubr.bf16.mxu0 0
        %601 = vmatmul.mubr.bf16.gmra.mxu0 %v556
        %v602 = vpop.f32.mrf.mxu0
        %v603 = vadd.f32 %v484, %v602
        %v604 = vpop.f32.mrf.mxu0
        %v605 = vadd.f32 %v484, %v604
        %v606 = vpop.f32.mrf.mxu0
        %v607 = vpop.f32.mrf.mxu0
        %608 = vdwg.mxu0
        %609 = vmatprep.subr.bf16.mxu0 0
        %610 = vmatpush1.bf16.msra.mxu0 0
        %611 = vmatprep.subr.bf16.mxu0 0
        %612 = vmatpush1.bf16.msra.mxu0 0
        %613 = vmatprep.subr.bf16.mxu0 0
        %614 = vmatpush1.bf16.msra.mxu0 0
        %615 = vmatprep.subr.bf16.mxu0 0
        %616 = vmatpush1.bf16.msra.mxu0 %v566
        %617 = vmatprep.subr.bf16.mxu0 0
        %618 = vmatpush1.bf16.msra.mxu0 %v524
        %619 = vmatprep.subr.bf16.mxu0 0
        %620 = vmatpush1.bf16.msra.mxu0 %v518
        %621 = vmatprep.subr.bf16.mxu0 0
        %622 = vmatpush1.bf16.msra.mxu0 %v512
        %623 = vmatprep.subr.bf16.mxu0 0
        %624 = vmatpush1.bf16.msra.mxu0 %v506
        %625 = vmatprep.subr.bf16.mxu0 0
        %626 = vmatpush2.bf16.msra.mxu0 0
        %627 = vmatprep.subr.bf16.mxu0 0
        %628 = vmatpush2.bf16.msra.mxu0 0
        %629 = vmatprep.subr.bf16.mxu0 0
        %630 = vmatpush2.bf16.msra.mxu0 0
        %631 = vmatprep.subr.bf16.mxu0 0
        %632 = vmatpush2.bf16.msra.mxu0 0
        %633 = vmatprep.subr.bf16.mxu0 0
        %634 = vmatpush2.bf16.msra.mxu0 0
        %635 = vmatprep.subr.bf16.mxu0 0
        %636 = vmatpush2.bf16.msra.mxu0 0
        %637 = vmatprep.subr.bf16.mxu0 0
        %638 = vmatpush2.bf16.msra.mxu0 0
        %639 = vmatprep.subr.bf16.mxu0 0
        %640 = vmatpush2.bf16.msra.mxu0 0
        %641 = vmatprep.mubr.bf16.mxu0 0
        %642 = vmatmul.mubr.bf16.gmra.mxu0 %v556
        %v643 = vpop.f32.mrf.mxu0
        %v644 = vadd.f32 %v484, %v643
        %v645 = vpop.f32.mrf.mxu0
        %v646 = vpop.f32.mrf.mxu0
        %v647 = vpop.f32.mrf.mxu0
        %648 = vdwg.mxu0
        %650 = vset.pattern.permute.xlu0 0
        %651 = vperm.xlu0 %650, %v479
        %v652 = vpop.permute.xlu0 %651
        %v654 = vmul.f32 %v652, %v603
        %v655 = vmul.f32 %v652, %v605
        %v656 = vmul.f32 %v652, %v644
        %v657 = vmax.f32 %v654, 0.0
        %v658 = vmax.f32 %v655, 0.0
        %v659 = vmax.f32 %v656, 0.0
        %v660 = vld [vmem:[%s7] sm:$0x7]
        %v662 = vlaneseq
        %v663 = vshrl.u32 %v662, 7
        %v664 = vsub.s32 0, %v663
        %v665 = vrot.slane %v660, %v664
        %v666 = vlaneseq
        %v667 = vshrl.u32 %v666, 7
        %v668 = vsub.s32 1, %v667
        %v669 = vrot.slane %v660, %v668
        %v670 = vlaneseq
        %v671 = vshrl.u32 %v670, 7
        %v672 = vsub.s32 2, %v671
        %v673 = vrot.slane %v660, %v672
        %v677 = vmul.f32 %v657, %v665
        %v678 = vmul.f32 %v658, %v669
        %v679 = vmul.f32 %v659, %v673
        %v680 = vld [vmem:[%s4] sm:$0xf]
        %684 = vrot.lane.b32.xlu0 %v677, 127
        %v685 = vpop.permute.xlu0 %684
        %686 = vrot.lane.b32.xlu0 %v678, 127
        %v687 = vpop.permute.xlu0 %686
        %688 = vrot.lane.b32.xlu0 %v679, 127
        %v689 = vpop.permute.xlu0 %688
        %v690 = vsel %vm355, %v685, %v687
        %v691 = vsel %vm355, %v687, %v689
        %695 = vrot.lane.b32.xlu0 %v677, 126
        %v696 = vpop.permute.xlu0 %695
        %697 = vrot.lane.b32.xlu0 %v678, 126
        %v698 = vpop.permute.xlu0 %697
        %699 = vrot.lane.b32.xlu0 %v679, 126
        %v700 = vpop.permute.xlu0 %699
        %v701 = vsel %vm367, %v696, %v698
        %v702 = vsel %vm367, %v698, %v700
        %706 = vrot.lane.b32.xlu0 %v677, 110
        %v707 = vpop.permute.xlu0 %706
        %708 = vrot.lane.b32.xlu0 %v678, 110
        %v709 = vpop.permute.xlu0 %708
        %710 = vrot.lane.b32.xlu0 %v679, 110
        %v711 = vpop.permute.xlu0 %710
        %v712 = vsel %vm382, %v707, %v709
        %v713 = vsel %vm382, %v709, %v711
        %717 = vrot.lane.b32.xlu0 %v677, 109
        %v718 = vpop.permute.xlu0 %717
        %719 = vrot.lane.b32.xlu0 %v678, 109
        %v720 = vpop.permute.xlu0 %719
        %721 = vrot.lane.b32.xlu0 %v679, 109
        %v722 = vpop.permute.xlu0 %721
        %v723 = vsel %vm397, %v718, %v720
        %v724 = vsel %vm397, %v720, %v722
        %728 = vrot.lane.b32.xlu0 %v677, 108
        %v729 = vpop.permute.xlu0 %728
        %730 = vrot.lane.b32.xlu0 %v678, 108
        %v731 = vpop.permute.xlu0 %730
        %732 = vrot.lane.b32.xlu0 %v679, 108
        %v733 = vpop.permute.xlu0 %732
        %v734 = vsel %vm412, %v729, %v731
        %v735 = vsel %vm412, %v731, %v733
        %739 = vrot.lane.b32.xlu0 %v677, 92
        %v740 = vpop.permute.xlu0 %739
        %741 = vrot.lane.b32.xlu0 %v678, 92
        %v742 = vpop.permute.xlu0 %741
        %743 = vrot.lane.b32.xlu0 %v679, 92
        %v744 = vpop.permute.xlu0 %743
        %v745 = vsel %vm427, %v740, %v742
        %v746 = vsel %vm427, %v742, %v744
        %750 = vrot.lane.b32.xlu0 %v677, 91
        %v751 = vpop.permute.xlu0 %750
        %752 = vrot.lane.b32.xlu0 %v678, 91
        %v753 = vpop.permute.xlu0 %752
        %754 = vrot.lane.b32.xlu0 %v679, 91
        %v755 = vpop.permute.xlu0 %754
        %v756 = vsel %vm442, %v751, %v753
        %v757 = vsel %vm442, %v753, %v755
        %761 = vrot.lane.b32.xlu0 %v677, 90
        %v762 = vpop.permute.xlu0 %761
        %763 = vrot.lane.b32.xlu0 %v678, 90
        %v764 = vpop.permute.xlu0 %763
        %765 = vrot.lane.b32.xlu0 %v679, 90
        %v766 = vpop.permute.xlu0 %765
        %v767 = vsel %vm457, %v762, %v764
        %v768 = vsel %vm457, %v764, %v766
        %v772 = vpack.c.bf16 %v690, %v677
        %v773 = vpack.c.bf16 %v691, %v678
        %v774 = vpack.c.bf16 %v689, %v679
        %v775 = vpack.c.bf16 %v712, %v701
        %v776 = vpack.c.bf16 %v713, %v702
        %v777 = vpack.c.bf16 %v711, %v700
        %v778 = vpack.c.bf16 %v734, %v723
        %v779 = vpack.c.bf16 %v735, %v724
        %v780 = vpack.c.bf16 %v733, %v722
        %v781 = vpack.c.bf16 %v756, %v745
        %v782 = vpack.c.bf16 %v757, %v746
        %v783 = vpack.c.bf16 %v755, %v744
        %v784 = vpack.c.bf16 %v767, %v767
        %v785 = vpack.c.bf16 %v768, %v768
        %v786 = vpack.c.bf16 %v766, %v766
        %v787 = vld [vmem:[%s337] sm:$0xff]
        %v788 = vld [vmem:[%s5] sm:$0xff]
        %790 = vset.pattern.permute.xlu0 0
        %791 = vperm.xlu0 %790, %v788
        %v792 = vpop.permute.xlu0 %791
        %809 = vrot.lane.b32.xlu0 %v772, 111
        %v810 = vpop.permute.xlu0 %809
        %811 = vrot.lane.b32.xlu0 %v773, 111
        %v812 = vpop.permute.xlu0 %811
        %813 = vrot.lane.b32.xlu0 %v774, 111
        %v814 = vpop.permute.xlu0 %813
        %815 = vrot.lane.b32.xlu0 %v775, 111
        %v816 = vpop.permute.xlu0 %815
        %817 = vrot.lane.b32.xlu0 %v776, 111
        %v818 = vpop.permute.xlu0 %817
        %819 = vrot.lane.b32.xlu0 %v777, 111
        %v820 = vpop.permute.xlu0 %819
        %821 = vrot.lane.b32.xlu0 %v778, 111
        %v822 = vpop.permute.xlu0 %821
        %823 = vrot.lane.b32.xlu0 %v779, 111
        %v824 = vpop.permute.xlu0 %823
        %825 = vrot.lane.b32.xlu0 %v780, 111
        %v826 = vpop.permute.xlu0 %825
        %827 = vrot.lane.b32.xlu0 %v781, 111
        %v828 = vpop.permute.xlu0 %827
        %829 = vrot.lane.b32.xlu0 %v782, 111
        %v830 = vpop.permute.xlu0 %829
        %831 = vrot.lane.b32.xlu0 %v783, 111
        %v832 = vpop.permute.xlu0 %831
        %833 = vrot.lane.b32.xlu0 %v784, 111
        %v834 = vpop.permute.xlu0 %833
        %835 = vrot.lane.b32.xlu0 %v785, 111
        %v836 = vpop.permute.xlu0 %835
        %837 = vrot.lane.b32.xlu0 %v786, 111
        %v838 = vpop.permute.xlu0 %837
        %v839 = vsel %vm531, %v810, %v812
        %v840 = vsel %vm531, %v812, %v814
        %v841 = vsel %vm531, %v816, %v818
        %v842 = vsel %vm531, %v818, %v820
        %v843 = vsel %vm531, %v822, %v824
        %v844 = vsel %vm531, %v824, %v826
        %v845 = vsel %vm531, %v828, %v830
        %v846 = vsel %vm531, %v830, %v832
        %v847 = vsel %vm531, %v834, %v836
        %v848 = vsel %vm531, %v836, %v838
        %v862 = vsel %vm554, %v680, 0
        %v865 = vsel %vm558, %v847, 0
        %v868 = vsel %vm558, %v848, 0
        %v871 = vsel %vm558, %v838, 0
        %873 = vmatprep.subr.bf16.mxu0 0
        %874 = vmatpush1.bf16.msra.mxu0 0
        %875 = vmatprep.subr.bf16.mxu0 0
        %876 = vmatpush1.bf16.msra.mxu0 0
        %877 = vmatprep.subr.bf16.mxu0 0
        %878 = vmatpush1.bf16.msra.mxu0 0
        %879 = vmatprep.subr.bf16.mxu0 %v868
        %880 = vmatpush1.bf16.msra.mxu0 %v865
        %881 = vmatprep.subr.bf16.mxu0 %v846
        %882 = vmatpush1.bf16.msra.mxu0 %v845
        %883 = vmatprep.subr.bf16.mxu0 %v844
        %884 = vmatpush1.bf16.msra.mxu0 %v843
        %885 = vmatprep.subr.bf16.mxu0 %v842
        %886 = vmatpush1.bf16.msra.mxu0 %v841
        %887 = vmatprep.subr.bf16.mxu0 %v840
        %888 = vmatpush1.bf16.msra.mxu0 %v839
        %889 = vmatprep.subr.bf16.mxu0 0
        %890 = vmatpush2.bf16.msra.mxu0 0
        %891 = vmatprep.subr.bf16.mxu0 0
        %892 = vmatpush2.bf16.msra.mxu0 0
        %893 = vmatprep.subr.bf16.mxu0 0
        %894 = vmatpush2.bf16.msra.mxu0 0
        %895 = vmatprep.subr.bf16.mxu0 0
        %896 = vmatpush2.bf16.msra.mxu0 0
        %897 = vmatprep.subr.bf16.mxu0 0
        %898 = vmatpush2.bf16.msra.mxu0 0
        %899 = vmatprep.subr.bf16.mxu0 0
        %900 = vmatpush2.bf16.msra.mxu0 0
        %901 = vmatprep.subr.bf16.mxu0 0
        %902 = vmatpush2.bf16.msra.mxu0 0
        %903 = vmatprep.subr.bf16.mxu0 0
        %904 = vmatpush2.bf16.msra.mxu0 0
        %905 = vmatprep.mubr.bf16.mxu0 0
        %906 = vmatmul.mubr.bf16.gmra.mxu0 %v862
        %v907 = vpop.f32.mrf.mxu0
        %v908 = vadd.f32 %v792, %v907
        %v909 = vpop.f32.mrf.mxu0
        %v910 = vadd.f32 %v792, %v909
        %v911 = vpop.f32.mrf.mxu0
        %v912 = vpop.f32.mrf.mxu0
        %913 = vdwg.mxu0
        %914 = vmatprep.subr.bf16.mxu0 0
        %915 = vmatpush1.bf16.msra.mxu0 0
        %916 = vmatprep.subr.bf16.mxu0 0
        %917 = vmatpush1.bf16.msra.mxu0 0
        %918 = vmatprep.subr.bf16.mxu0 0
        %919 = vmatpush1.bf16.msra.mxu0 0
        %920 = vmatprep.subr.bf16.mxu0 0
        %921 = vmatpush1.bf16.msra.mxu0 %v871
        %922 = vmatprep.subr.bf16.mxu0 0
        %923 = vmatpush1.bf16.msra.mxu0 %v832
        %924 = vmatprep.subr.bf16.mxu0 0
        %925 = vmatpush1.bf16.msra.mxu0 %v826
        %926 = vmatprep.subr.bf16.mxu0 0
        %927 = vmatpush1.bf16.msra.mxu0 %v820
        %928 = vmatprep.subr.bf16.mxu0 0
        %929 = vmatpush1.bf16.msra.mxu0 %v814
        %930 = vmatprep.subr.bf16.mxu0 0
        %931 = vmatpush2.bf16.msra.mxu0 0
        %932 = vmatprep.subr.bf16.mxu0 0
        %933 = vmatpush2.bf16.msra.mxu0 0
        %934 = vmatprep.subr.bf16.mxu0 0
        %935 = vmatpush2.bf16.msra.mxu0 0
        %936 = vmatprep.subr.bf16.mxu0 0
        %937 = vmatpush2.bf16.msra.mxu0 0
        %938 = vmatprep.subr.bf16.mxu0 0
        %939 = vmatpush2.bf16.msra.mxu0 0
        %940 = vmatprep.subr.bf16.mxu0 0
        %941 = vmatpush2.bf16.msra.mxu0 0
        %942 = vmatprep.subr.bf16.mxu0 0
        %943 = vmatpush2.bf16.msra.mxu0 0
        %944 = vmatprep.subr.bf16.mxu0 0
        %945 = vmatpush2.bf16.msra.mxu0 0
        %946 = vmatprep.mubr.bf16.mxu0 0
        %947 = vmatmul.mubr.bf16.gmra.mxu0 %v862
        %v948 = vpop.f32.mrf.mxu0
        %v949 = vadd.f32 %v792, %v948
        %v950 = vpop.f32.mrf.mxu0
        %v951 = vpop.f32.mrf.mxu0
        %v952 = vpop.f32.mrf.mxu0
        %953 = vdwg.mxu0
        %954 = vrot.lane.b32.xlu0 %v341, 56
        %v955 = vpop.permute.xlu0 %954
        %956 = vrot.lane.b32.xlu0 %v342, 56
        %v957 = vpop.permute.xlu0 %956
        %958 = vrot.lane.b32.xlu0 %v343, 56
        %v959 = vpop.permute.xlu0 %958
        %vm960 = vcmask 457728
        %v961 = vsel %vm960, %v955, %v957
        %v962 = vsel %vm960, %v957, %v959
        %v966 = vadd.f32 %v908, %v961
        %v967 = vadd.f32 %v910, %v962
        %v968 = vadd.f32 %v949, %v959
        %970 = vset.pattern.permute.xlu0 0
        %971 = vperm.xlu0 %970, %v787
        %v972 = vpop.permute.xlu0 %971
        %v974 = vmul.f32 %v972, %v966
        %v975 = vmul.f32 %v972, %v967
        %v976 = vmul.f32 %v972, %v968
        %v977 = vmax.f32 %v974, 0.0
        %v978 = vmax.f32 %v975, 0.0
        %v979 = vmax.f32 %v976, 0.0
        %980 = vst [vmem:[%s324] sm:$0xff] %v977
        %981 = vst [vmem:[%s324 + $0x8] sm:$0xff] %v978
        %vm982 = vcmask 261120
        %983 = vst.msk [vmem:[%s324 + $0x10] sm:$0xff] %vm982, %v979
        %s984 = sand.u32 %s213, 1
        %s985 = scalar_lea.sflag [#allocation3], %s984
        %s986 = sand.u32 %s213, 1
        %s987 = smul.addr %s986, 24
        %s988 = scalar_lea.vmem [#allocation2], %s987
        // Predicated region
        $region53: #{tpu_custom_call.1} parent=51 // pred_check
          %p989 = pneg %p223
        $region54: #{tpu_custom_call.1} parent=51 // pred_check_branch
          %991 = sbr.rel (%p989) target = $region56
        $region55: #{tpu_custom_call.1} parent=51 // pred_region
          %s993 = ssub.s32 384, 384
          %994 = vsyncadd %s985, %s993
          %s995 = smul.addr %s22, 3
          %s996 = smul.addr %s995, 128
          %s997 = scalar_lea.hbm %s8, %s996
          %s999 = sshll.u32 %s988, 4
          %s1000 = int_to_ptr.vmem [resolvable:$true] %s999
          %1002 = dma.vmem_to_hbm [thread:$0]  %s1000, 384, %s997, %s985
        $region56: #{tpu_custom_call.1} parent=51 // pred_fallthru
          _
      $region52: #{tpu_custom_call.1} parent=5 // pred_fallthru
        _
      %p1003 = scmp.le.s32.totalorder 2, %s17
      // Predicated region
      $region57: #{tpu_custom_call.1} parent=5 // pred_check
        %p1004 = pneg %p1003
      $region58: #{tpu_custom_call.1} parent=5 // pred_check_branch
        %1006 = sbr.rel (%p1004) target = $region60
      $region59: #{tpu_custom_call.1} parent=5 // pred_region
        %s1007 = ssub.s32 %s17, 2
        // Predicated region
        $region61: #{tpu_custom_call.1} parent=59 // pred_check
          %p1008 = pneg %p229
        $region62: #{tpu_custom_call.1} parent=59 // pred_check_branch
          %1010 = sbr.rel (%p1008) target = $region64
        $region63: #{tpu_custom_call.1} parent=59 // pred_region
          %s1011 = sand.u32 %s214, 1
          %s1012 = scalar_lea.sflag [#allocation3], %s1011
          %s1013 = sand.u32 %s214, 1
          %s1014 = smul.addr %s1013, 24
          %s1015 = scalar_lea.vmem [#allocation2], %s1014
          %1016 = dma.done %s1012, 384
        $region64: #{tpu_custom_call.1} parent=59 // pred_fallthru
          _
      $region60: #{tpu_custom_call.1} parent=5 // pred_fallthru
        _
    $region6: #{tpu_custom_call.1} parent=1 // loop_footer
      %s21 = sadd.s32 1, %s17
    $region7: #{tpu_custom_call.1} parent=1 // loop_footer_branch
      %16 = sbr.rel target = $region3
    $region8: #{tpu_custom_call.1} parent=1 // loop_exit
      _
    %1017 = vsyncpa [#allocation3], 1
    %s1018 = scalar_lea.sflag [#allocation3], 1
    %1019 = vsyncpa %s1018, 1

</llo_original>
